<compile_context>
chip_gen: v5e
topology: v5e:2x2
jax: 0.10.0
libtpu: 0.0.40
codegen_flags: <defaults>
</compile_context>

<pallas_src>
import jax
import jax.numpy as jnp
from jax.experimental import pallas as pl
from jax.experimental.pallas import tpu as pltpu


# ---------------------------------------------------------------------------
# Fused kernel: y = relu(x @ w1 + b1) @ w2 + b2   (one batch tile per step)
# Operands are bf16, accumulation is f32 on the MXU, epilogue is f32 VPU.
# ---------------------------------------------------------------------------
def _explainable_mlp_kernel(x_ref, w1_ref, b1_ref, w2_ref, b2_ref, o_ref):
    # Layer 1: bf16 MXU matmul -> f32 accumulator, VPU bias + ReLU (f32).
    h = jnp.dot(x_ref[...], w1_ref[...], preferred_element_type=jnp.float32)
    h = jnp.maximum(h + b1_ref[...], 0.0)
    # Layer 2: cast hidden to bf16 for the MXU, accumulate in f32, bias in f32.
    y = jnp.dot(h.astype(w2_ref.dtype), w2_ref[...],
                preferred_element_type=jnp.float32)
    o_ref[...] = (y + b2_ref[...]).astype(o_ref.dtype)


def _round_up(v, m):
    return ((v + m - 1) // m) * m


def explainable_model_forward(params, x, *, block_b=512,
                              compute_dtype=jnp.bfloat16):
    """Mirrors ExplainableModel.forward: returns (model(x), identity(model(x)))."""
    w1, b1 = params["w1"], params["b1"]
    w2, b2 = params["w2"], params["b2"]
    B, IN = x.shape
    HID = w1.shape[1]
    OUT = w2.shape[1]

    # Batch tile selection:
    #   * B <= 8: single sublane tile, one grid step (latency floor anyway).
    #   * B >  8: at least 2 sublane-aligned steps so the "parallel" batch
    #     axis shards across v7x's two TensorCores, capped at block_b rows so
    #     each step still amortizes fixed overhead over lots of MXU work.
    if B <= 8:
        tb = B
    else:
        tb = min(block_b, _round_up(pl.cdiv(B, 2), 8))
    grid = (pl.cdiv(B, tb),)

    # bf16 operands for both MXU passes; biases stay f32 (applied to the
    # f32 accumulator). Output stays in the caller's dtype (f32 here).
    xc = x.astype(compute_dtype)
    w1c = w1.astype(compute_dtype)
    w2c = w2.astype(compute_dtype)
    b1f = b1.astype(jnp.float32)
    b2f = b2.astype(jnp.float32)

    itemsize = jnp.dtype(compute_dtype).itemsize
    out_itemsize = jnp.dtype(x.dtype).itemsize

    # Advisory cost estimate so XLA can schedule around this custom call.
    cost = pl.CostEstimate(
        flops=2 * B * IN * HID + 2 * B * HID * OUT,
        transcendentals=0,
        bytes_accessed=(B * IN * itemsize                 # x
                        + IN * HID * itemsize             # w1
                        + HID * OUT * itemsize            # w2
                        + (HID + OUT) * 4                 # biases (f32)
                        + B * OUT * out_itemsize),        # output
    )

    # Scoped-VMEM budget: double-buffered x + out tiles, resident weights,
    # 1 MiB headroom; never below 16 MiB, capped at 60 MiB (v7x physical 64).
    tile_bytes = 2 * (tb * IN * itemsize + tb * OUT * out_itemsize)
    weight_bytes = (IN * HID + HID * OUT) * itemsize + (HID + OUT) * 4
    vmem_need = tile_bytes + weight_bytes + (1 << 20)
    vmem_limit = int(min(max(vmem_need, 16 << 20), 60 << 20))

    vmem = pltpu.MemorySpace.VMEM
    out = pl.pallas_call(
        _explainable_mlp_kernel,
        out_shape=jax.ShapeDtypeStruct((B, OUT), x.dtype),
        grid=grid,
        in_specs=[
            # activations: tiled over batch
            pl.BlockSpec((tb, IN), lambda i: (i, 0), memory_space=vmem),
            # weights / biases: full-array, VMEM-resident for the whole call
            pl.BlockSpec((IN, HID), lambda i: (0, 0), memory_space=vmem),
            pl.BlockSpec((1, HID), lambda i: (0, 0), memory_space=vmem),
            pl.BlockSpec((HID, OUT), lambda i: (0, 0), memory_space=vmem),
            pl.BlockSpec((1, OUT), lambda i: (0, 0), memory_space=vmem),
        ],
        out_specs=pl.BlockSpec((tb, OUT), lambda i: (i, 0), memory_space=vmem),
        compiler_params=pltpu.CompilerParams(
            dimension_semantics=("parallel",),
            vmem_limit_bytes=vmem_limit,
        ),
        cost_estimate=cost,
    )(xc, w1c, b1f, w2c, b2f)

    # explanation_layer = nn.Identity() -> returns the input tensor unchanged.
    explanation = out
    return out, explanation


# ---------------------------------------------------------------------------
# Deterministic parameter construction for the injected inner model.
# Biases are pre-shaped (1, N); all feature dims are 128-lane aligned.
# ---------------------------------------------------------------------------
def init_params(key, in_dim, hid_dim, out_dim):
    k1, k2 = jax.random.split(key)

    def lin(k, fan_in, fan_out):
        scale = 1.0 / jnp.sqrt(jnp.float32(fan_in))
        w = jax.random.uniform(k, (fan_in, fan_out), jnp.float32, -scale, scale)
        b = jnp.zeros((1, fan_out), jnp.float32)
        return w, b

    w1, b1 = lin(k1, in_dim, hid_dim)
    w2, b2 = lin(k2, hid_dim, out_dim)
    return {"w1": w1, "b1": b1, "w2": w2, "b2": b2}


def _reference_forward(params, x):
    """Pure-JAX reference mirroring the kernel's bf16-operand / f32-accum math."""
    xb = x.astype(jnp.bfloat16).astype(jnp.float32)
    w1b = params["w1"].astype(jnp.bfloat16).astype(jnp.float32)
    w2b = params["w2"].astype(jnp.bfloat16).astype(jnp.float32)
    h = jnp.maximum(xb @ w1b + params["b1"], 0.0)
    hb = h.astype(jnp.bfloat16).astype(jnp.float32)
    return hb @ w2b + params["b2"]


if __name__ == "__main__":
    # Small, lane-dense shapes: features=128 (lanes), batch maps to sublanes.
    IN, HID, OUT = 128, 128, 128

    key = jax.random.PRNGKey(0)
    k_param, k_x1, k_x2 = jax.random.split(key, 3)
    params = init_params(k_param, IN, HID, OUT)

    fwd = jax.jit(explainable_model_forward)

    # Case 1: tiny batch (B=8) — single grid step (latency-floor path).
    B1 = 8
    x1 = jax.random.normal(k_x1, (B1, IN), jnp.float32)
    y1, expl1 = fwd(params, x1)
    jax.block_until_ready((y1, expl1))

    y1_ref = _reference_forward(params, x1)
    assert y1.shape == (B1, OUT) and expl1.shape == (B1, OUT)
    assert bool(jnp.allclose(y1, y1_ref, atol=1e-2, rtol=1e-2))
    # Identity explanation layer: explanation is exactly the model output.
    assert bool(jnp.array_equal(y1, expl1))

    # Case 2: B=256 — exercises the >=2-step "parallel" grid (megacore path).
    B2 = 256
    x2 = jax.random.normal(k_x2, (B2, IN), jnp.float32)
    y2, expl2 = fwd(params, x2)
    jax.block_until_ready((y2, expl2))

    y2_ref = _reference_forward(params, x2)
    assert y2.shape == (B2, OUT) and expl2.shape == (B2, OUT)
    assert bool(jnp.allclose(y2, y2_ref, atol=1e-2, rtol=1e-2))
    assert bool(jnp.array_equal(y2, expl2))

    print("KERNEL_OK")
</pallas_src>

<mosaic_0001>
module attributes {stable_mosaic.version = 11 : i64} {
  func.func @_explainable_mlp_kernel(%arg0: i32, %arg1: memref<8x128xbf16, #tpu.memory_space<vmem>>, %arg2: memref<128x128xbf16, #tpu.memory_space<vmem>>, %arg3: memref<1x128xf32, #tpu.memory_space<vmem>>, %arg4: memref<128x128xbf16, #tpu.memory_space<vmem>>, %arg5: memref<1x128xf32, #tpu.memory_space<vmem>>, %arg6: memref<8x128xf32, #tpu.memory_space<vmem>>) attributes {dimension_semantics = [#tpu.dimension_semantics<parallel>], iteration_bounds = array<i64: 1>, scalar_prefetch = 0 : i64, scratch_operands = 0 : i64, tpu.core_type = #tpu.core_type<tc>, window_params = [{transform_indices = @transform_0, window_bounds = array<i64: 8, 128>}, {pipeline_mode = #tpu.pipeline_mode<synchronous>, transform_indices = @transform_1, window_bounds = array<i64: 128, 128>}, {pipeline_mode = #tpu.pipeline_mode<synchronous>, transform_indices = @transform_2, window_bounds = array<i64: 1, 128>}, {pipeline_mode = #tpu.pipeline_mode<synchronous>, transform_indices = @transform_3, window_bounds = array<i64: 128, 128>}, {pipeline_mode = #tpu.pipeline_mode<synchronous>, transform_indices = @transform_4, window_bounds = array<i64: 1, 128>}, {transform_indices = @transform_5, window_bounds = array<i64: 8, 128>}]} {
    %c0 = arith.constant 0 : index
    %c0_0 = arith.constant 0 : index
    %0 = vector.load %arg1[%c0, %c0_0] : memref<8x128xbf16, #tpu.memory_space<vmem>>, vector<8x128xbf16>
    %c0_1 = arith.constant 0 : index
    %c0_2 = arith.constant 0 : index
    %1 = vector.load %arg2[%c0_1, %c0_2] : memref<128x128xbf16, #tpu.memory_space<vmem>>, vector<128x128xbf16>
    %cst = arith.constant dense<0.000000e+00> : vector<8x128xf32>
    %2 = tpu.matmul %0, %1, %cst {dimension_numbers = #tpu.dot_dimension_numbers<[1], [0], [0], [1], [0, 0, 1, 1], [], []>} : vector<8x128xbf16>, vector<128x128xbf16>, vector<8x128xf32> -> vector<8x128xf32>
    %c0_3 = arith.constant 0 : index
    %c0_4 = arith.constant 0 : index
    %3 = vector.load %arg3[%c0_3, %c0_4] : memref<1x128xf32, #tpu.memory_space<vmem>>, vector<1x128xf32>
    %4 = vector.broadcast %3 : vector<1x128xf32> to vector<8x128xf32>
    %5 = arith.addf %2, %4 : vector<8x128xf32>
    %cst_5 = arith.constant 0.000000e+00 : f32
    %6 = vector.broadcast %cst_5 : f32 to vector<8x128xf32>
    %7 = arith.maximumf %5, %6 : vector<8x128xf32>
    %8 = arith.truncf %7 : vector<8x128xf32> to vector<8x128xbf16>
    %c0_6 = arith.constant 0 : index
    %c0_7 = arith.constant 0 : index
    %9 = vector.load %arg4[%c0_6, %c0_7] : memref<128x128xbf16, #tpu.memory_space<vmem>>, vector<128x128xbf16>
    %cst_8 = arith.constant dense<0.000000e+00> : vector<8x128xf32>
    %10 = tpu.matmul %8, %9, %cst_8 {dimension_numbers = #tpu.dot_dimension_numbers<[1], [0], [0], [1], [0, 0, 1, 1], [], []>} : vector<8x128xbf16>, vector<128x128xbf16>, vector<8x128xf32> -> vector<8x128xf32>
    %c0_9 = arith.constant 0 : index
    %c0_10 = arith.constant 0 : index
    %11 = vector.load %arg5[%c0_9, %c0_10] : memref<1x128xf32, #tpu.memory_space<vmem>>, vector<1x128xf32>
    %12 = vector.broadcast %11 : vector<1x128xf32> to vector<8x128xf32>
    %13 = arith.addf %10, %12 : vector<8x128xf32>
    %c0_11 = arith.constant 0 : index
    %c0_12 = arith.constant 0 : index
    %14 = vector.load %arg6[%c0_11, %c0_12] : memref<8x128xf32, #tpu.memory_space<vmem>>, vector<8x128xf32>
    tpu.vector_store %arg6[%c0_11, %c0_12], %13 {strides = array<i32>} : memref<8x128xf32, #tpu.memory_space<vmem>>, vector<8x128xf32>,
    return
  }
  func.func @transform_0(%arg0: i32) -> (i32, i32) {
    %c0_i32 = arith.constant 0 : i32
    %c0_i32_0 = arith.constant 0 : i32
    return %arg0, %c0_i32 : i32, i32
  }
  func.func @transform_1(%arg0: i32) -> (i32, i32) {
    %c0_i32 = arith.constant 0 : i32
    %c0_i32_0 = arith.constant 0 : i32
    %c0_i32_1 = arith.constant 0 : i32
    return %c0_i32, %c0_i32_0 : i32, i32
  }
  func.func @transform_2(%arg0: i32) -> (i32, i32) {
    %c0_i32 = arith.constant 0 : i32
    %c0_i32_0 = arith.constant 0 : i32
    %c0_i32_1 = arith.constant 0 : i32
    return %c0_i32, %c0_i32_0 : i32, i32
  }
  func.func @transform_3(%arg0: i32) -> (i32, i32) {
    %c0_i32 = arith.constant 0 : i32
    %c0_i32_0 = arith.constant 0 : i32
    %c0_i32_1 = arith.constant 0 : i32
    return %c0_i32, %c0_i32_0 : i32, i32
  }
  func.func @transform_4(%arg0: i32) -> (i32, i32) {
    %c0_i32 = arith.constant 0 : i32
    %c0_i32_0 = arith.constant 0 : i32
    %c0_i32_1 = arith.constant 0 : i32
    return %c0_i32, %c0_i32_0 : i32, i32
  }
  func.func @transform_5(%arg0: i32) -> (i32, i32) {
    %c0_i32 = arith.constant 0 : i32
    %c0_i32_0 = arith.constant 0 : i32
    return %arg0, %c0_i32 : i32, i32
  }
}

</mosaic_0001>

<llo_original>
// kernel: explainable_model_forward.1
$region0: #{explainable_model_forward.1}
  #allocation0 [shape = 'u32[]', space=smem, size = 0x4, offset = 0x4, fixed_abs, tag = 'smem constant byte address 0x4 - core index']
  #allocation1 [shape = 'u32[72,128]{1,0:T(1,128)}', space=vmem, size = 0x9000, scoped, tag = 'internal scratch']
  %s0 = inlined_call_operand.vmem [shape: bf16[8,128], index: 0, kind: input, shape index: {}]
  %s1 = inlined_call_operand.vmem [shape: bf16[128,128], index: 1, kind: input, shape index: {}]
  %s2 = inlined_call_operand.vmem [shape: f32[1,128], index: 2, kind: input, shape index: {}]
  %s3 = inlined_call_operand.vmem [shape: bf16[128,128], index: 3, kind: input, shape index: {}]
  %s4 = inlined_call_operand.vmem [shape: f32[1,128], index: 4, kind: input, shape index: {}]
  %s5 = inlined_call_operand.vmem [shape: f32[8,128], index: 5, kind: output, shape index: {}]
  %s6 = sld [smem:[#allocation0]]
  $region30: #{explainable_model_forward.1} parent=0
    _
  %s8 = ssub.s32 1, %s6
  %s9 = scalar_select 0, %s8, %s6
  // Predicated region
  $region2: #{explainable_model_forward.1} parent=0 // pred_check
    _
  $region3: #{explainable_model_forward.1} parent=0 // pred_check_branch
    %11 = sbr.rel (0) target = $region5
  $region4: #{explainable_model_forward.1} parent=0 // pred_region
    _
  $region5: #{explainable_model_forward.1} parent=0 // pred_fallthru
    _
  // Predicated region
  $region6: #{explainable_model_forward.1} parent=0 // pred_check
    _
  $region7: #{explainable_model_forward.1} parent=0 // pred_check_branch
    %13 = sbr.rel (0) target = $region9
  $region8: #{explainable_model_forward.1} parent=0 // pred_region
    _
  $region9: #{explainable_model_forward.1} parent=0 // pred_fallthru
    _
  // Predicated region
  $region10: #{explainable_model_forward.1} parent=0 // pred_check
    _
  $region11: #{explainable_model_forward.1} parent=0 // pred_check_branch
    %15 = sbr.rel (0) target = $region13
  $region12: #{explainable_model_forward.1} parent=0 // pred_region
    _
  $region13: #{explainable_model_forward.1} parent=0 // pred_fallthru
    _
  // Predicated region
  $region14: #{explainable_model_forward.1} parent=0 // pred_check
    _
  $region15: #{explainable_model_forward.1} parent=0 // pred_check_branch
    %17 = sbr.rel (0) target = $region17
  $region16: #{explainable_model_forward.1} parent=0 // pred_region
    _
  $region17: #{explainable_model_forward.1} parent=0 // pred_fallthru
    _
  // Predicated region
  $region18: #{explainable_model_forward.1} parent=0 // pred_check
    _
  $region19: #{explainable_model_forward.1} parent=0 // pred_check_branch
    %19 = sbr.rel (0) target = $region21
  $region20: #{explainable_model_forward.1} parent=0 // pred_region
    _
  $region21: #{explainable_model_forward.1} parent=0 // pred_fallthru
    _
  %v20 = vld [vmem:[%s0] sm:$0xf]
  %v21 = vld [vmem:[%s1] sm:$0xf]
  %v22 = vld [vmem:[%s1 + $0x4] sm:$0xf]
  %v23 = vld [vmem:[%s1 + $0x8] sm:$0xf]
  %v24 = vld [vmem:[%s1 + $0xc] sm:$0xf]
  %v25 = vld [vmem:[%s1 + $0x10] sm:$0xf]
  %v26 = vld [vmem:[%s1 + $0x14] sm:$0xf]
  %v27 = vld [vmem:[%s1 + $0x18] sm:$0xf]
  %v28 = vld [vmem:[%s1 + $0x1c] sm:$0xf]
  %v29 = vld [vmem:[%s1 + $0x20] sm:$0xf]
  %v30 = vld [vmem:[%s1 + $0x24] sm:$0xf]
  %v31 = vld [vmem:[%s1 + $0x28] sm:$0xf]
  %v32 = vld [vmem:[%s1 + $0x2c] sm:$0xf]
  %v33 = vld [vmem:[%s1 + $0x30] sm:$0xf]
  %v34 = vld [vmem:[%s1 + $0x34] sm:$0xf]
  %v35 = vld [vmem:[%s1 + $0x38] sm:$0xf]
  %v36 = vld [vmem:[%s1 + $0x3c] sm:$0xf]
  %v37 = vld [vmem:[%s2] sm:$0x1]
  %v39 = vperm.slane %v37, 0
  %v57 = vunpack.c.l.b16 %v21
  %v58 = vunpack.c.l.b16 %v22
  %v59 = vunpack.c.l.b16 %v23
  %v60 = vunpack.c.l.b16 %v24
  %v61 = vunpack.c.l.b16 %v25
  %v62 = vunpack.c.l.b16 %v26
  %v63 = vunpack.c.l.b16 %v27
  %v64 = vunpack.c.l.b16 %v28
  %v65 = vunpack.c.l.b16 %v29
  %v66 = vunpack.c.l.b16 %v30
  %v67 = vunpack.c.l.b16 %v31
  %v68 = vunpack.c.l.b16 %v32
  %v69 = vunpack.c.l.b16 %v33
  %v70 = vunpack.c.l.b16 %v34
  %v71 = vunpack.c.l.b16 %v35
  %v72 = vunpack.c.l.b16 %v36
  %v73 = vpack.c.b16 %v58, %v57
  %v74 = vpack.c.b16 %v60, %v59
  %v75 = vpack.c.b16 %v62, %v61
  %v76 = vpack.c.b16 %v64, %v63
  %v77 = vpack.c.b16 %v66, %v65
  %v78 = vpack.c.b16 %v68, %v67
  %v79 = vpack.c.b16 %v70, %v69
  %v80 = vpack.c.b16 %v72, %v71
  %89 = vmatpush.bf16.msra.mxu0 %v80
  %90 = vmatpush.bf16.msra.mxu0 %v79
  %91 = vmatpush.bf16.msra.mxu0 %v78
  %92 = vmatpush.bf16.msra.mxu0 %v77
  %93 = vmatpush.bf16.msra.mxu0 %v76
  %94 = vmatpush.bf16.msra.mxu0 %v75
  %95 = vmatpush.bf16.msra.mxu0 %v74
  %96 = vmatpush.bf16.msra.mxu0 %v73
  %97 = vmatmul.bf16.gmra.mxu0 %v20
  %v98 = vpop.f32.mrf.mxu0
  %v99 = vadd.f32 %v39, %v98
  %v100 = vpop.f32.mrf.mxu0
  %101 = vdwg.mxu0
  %v102 = vmax.f32 %v99, 0.0
  %v103 = vpack.c.bf16 %v102, %v102
  %v104 = vld [vmem:[%s3] sm:$0xf]
  %v105 = vld [vmem:[%s3 + $0x4] sm:$0xf]
  %v106 = vld [vmem:[%s3 + $0x8] sm:$0xf]
  %v107 = vld [vmem:[%s3 + $0xc] sm:$0xf]
  %v108 = vld [vmem:[%s3 + $0x10] sm:$0xf]
  %v109 = vld [vmem:[%s3 + $0x14] sm:$0xf]
  %v110 = vld [vmem:[%s3 + $0x18] sm:$0xf]
  %v111 = vld [vmem:[%s3 + $0x1c] sm:$0xf]
  %v112 = vld [vmem:[%s3 + $0x20] sm:$0xf]
  %v113 = vld [vmem:[%s3 + $0x24] sm:$0xf]
  %v114 = vld [vmem:[%s3 + $0x28] sm:$0xf]
  %v115 = vld [vmem:[%s3 + $0x2c] sm:$0xf]
  %v116 = vld [vmem:[%s3 + $0x30] sm:$0xf]
  %v117 = vld [vmem:[%s3 + $0x34] sm:$0xf]
  %v118 = vld [vmem:[%s3 + $0x38] sm:$0xf]
  %v119 = vld [vmem:[%s3 + $0x3c] sm:$0xf]
  %v120 = vld [vmem:[%s4] sm:$0x1]
  %v122 = vperm.slane %v120, 0
  %v140 = vunpack.c.l.b16 %v104
  %v141 = vunpack.c.l.b16 %v105
  %v142 = vunpack.c.l.b16 %v106
  %v143 = vunpack.c.l.b16 %v107
  %v144 = vunpack.c.l.b16 %v108
  %v145 = vunpack.c.l.b16 %v109
  %v146 = vunpack.c.l.b16 %v110
  %v147 = vunpack.c.l.b16 %v111
  %v148 = vunpack.c.l.b16 %v112
  %v149 = vunpack.c.l.b16 %v113
  %v150 = vunpack.c.l.b16 %v114
  %v151 = vunpack.c.l.b16 %v115
  %v152 = vunpack.c.l.b16 %v116
  %v153 = vunpack.c.l.b16 %v117
  %v154 = vunpack.c.l.b16 %v118
  %v155 = vunpack.c.l.b16 %v119
  %v156 = vpack.c.b16 %v141, %v140
  %v157 = vpack.c.b16 %v143, %v142
  %v158 = vpack.c.b16 %v145, %v144
  %v159 = vpack.c.b16 %v147, %v146
  %v160 = vpack.c.b16 %v149, %v148
  %v161 = vpack.c.b16 %v151, %v150
  %v162 = vpack.c.b16 %v153, %v152
  %v163 = vpack.c.b16 %v155, %v154
  %172 = vmatpush.bf16.msra.mxu0 %v163
  %173 = vmatpush.bf16.msra.mxu0 %v162
  %174 = vmatpush.bf16.msra.mxu0 %v161
  %175 = vmatpush.bf16.msra.mxu0 %v160
  %176 = vmatpush.bf16.msra.mxu0 %v159
  %177 = vmatpush.bf16.msra.mxu0 %v158
  %178 = vmatpush.bf16.msra.mxu0 %v157
  %179 = vmatpush.bf16.msra.mxu0 %v156
  %180 = vmatmul.bf16.gmra.mxu0 %v103
  %v181 = vpop.f32.mrf.mxu0
  %v182 = vadd.f32 %v122, %v181
  %v183 = vpop.f32.mrf.mxu0
  %184 = vdwg.mxu0
  %185 = vst [vmem:[%s5] sm:$0xff] %v182
  // Predicated region
  $region22: #{explainable_model_forward.1} parent=0 // pred_check
    _
  $region23: #{explainable_model_forward.1} parent=0 // pred_check_branch
    %187 = sbr.rel (0) target = $region25
  $region24: #{explainable_model_forward.1} parent=0 // pred_region
    _
  $region25: #{explainable_model_forward.1} parent=0 // pred_fallthru
    _
  // Predicated region
  $region26: #{explainable_model_forward.1} parent=0 // pred_check
    _
  $region27: #{explainable_model_forward.1} parent=0 // pred_check_branch
    %189 = sbr.rel (0) target = $region29
  $region28: #{explainable_model_forward.1} parent=0 // pred_region
    _
  $region29: #{explainable_model_forward.1} parent=0 // pred_fallthru
    _

</llo_original>
